<compile_context>
chip_gen: v5e
topology: v5e:2x2
jax: 0.10.0
libtpu: 0.0.40
codegen_flags: <defaults>
</compile_context>

<pallas_src>
import functools

import numpy as np
import jax
import jax.numpy as jnp
from jax.experimental import pallas as pl
from jax.experimental.pallas import tpu as pltpu


def _round_up(x, m):
    return (x + m - 1) // m * m


_VMEM_LIMIT = 48 * 1024 * 1024     # safe on v5e/v6e (128 MiB) and v7x (64 MiB physical)
_VMEM_BUDGET = 40 * 1024 * 1024    # what we plan tiles against (leave pipeline headroom)


# ----------------------------------------------------------------------------
# Pass 1 (BN path): y = P @ W2 streamed out (bf16) + per-channel sum / sum-sq
# accumulated directly into a resident (8, Cp) output block.
#   grid = (no, ni): outer "parallel" (megacore-shardable partials), inner "arbitrary".
# ----------------------------------------------------------------------------
def _conv_stats_kernel(p_ref, w_ref, y_ref, sums_ref):
    @pl.when(pl.program_id(1) == 0)
    def _init():
        sums_ref[...] = jnp.zeros_like(sums_ref)

    y = jnp.dot(p_ref[...], w_ref[...], preferred_element_type=jnp.float32)
    y_ref[...] = y.astype(y_ref.dtype)
    sums_ref[0:1, :] += jnp.sum(y, axis=0, keepdims=True)
    sums_ref[1:2, :] += jnp.sum(y * y, axis=0, keepdims=True)


# ----------------------------------------------------------------------------
# Pass 2 (BN path): purely elementwise  z = y*A + B ; LeakyReLU.   grid=(nm,) parallel.
# ----------------------------------------------------------------------------
def _affine_act_kernel(y_ref, prm_ref, o_ref, *, slope):
    z = y_ref[...].astype(jnp.float32) * prm_ref[0:1, :] + prm_ref[1:2, :]
    o_ref[...] = jnp.where(z >= 0, z, slope * z).astype(o_ref.dtype)


# ----------------------------------------------------------------------------
# last_layer path: single fused pass  tanh(P @ W2 + bias).   grid=(nm,) parallel.
# ----------------------------------------------------------------------------
def _conv_tanh_kernel(p_ref, w_ref, prm_ref, o_ref):
    y = jnp.dot(p_ref[...], w_ref[...], preferred_element_type=jnp.float32)
    z = y + prm_ref[1:2, :]
    # z/(|z|+1e-8)*tanh(|z|) == tanh(z) for real elementwise z (up to the 1e-8 epsilon).
    o_ref[...] = jnp.tanh(z).astype(o_ref.dtype)


# ----------------------------------------------------------------------------
# Wrapper: layout glue (im2col, complex->real weight folding, A/B fold) in JAX;
# hot loops in Pallas.
#   x: (N, Cin, H, W, 2); w_*: (Cin, Cout, K, K); b_*, gamma, beta: (Cout,)
# ----------------------------------------------------------------------------
@functools.partial(jax.jit, static_argnames=("last_layer", "tile_m"))
def cconv_trans_block(x, w_re, w_im, b_re, b_im, gamma, beta,
                      *, last_layer=False, tile_m=1024):
    x = x.astype(jnp.float32)
    N, Cin, H, W, _ = x.shape
    _, Cout, K, _ = w_re.shape
    Ho, Wo = H + K - 1, W + K - 1
    M = N * Ho * Wo
    C2 = 2 * Cout
    Cp = _round_up(C2, 128)               # lane-padded output channel dim
    Kc = K * K * 2 * Cin
    Kcp = _round_up(Kc, 128)              # lane-padded contraction dim

    # ---- M-tile from an explicit VMEM budget (multiple of 128) -------------------------
    w_bytes = 2 * Kcp * Cp * 2                                 # double-buffered bf16 weights
    per_row = 4 * (Kcp + Cp)                                   # bf16 in + bf16 out, 2 buffers
    tm_cap = max(128, (_VMEM_BUDGET - w_bytes) // per_row // 128 * 128)
    tm = max(128, min(_round_up(min(tile_m, M), 128), tm_cap))
    Mp = _round_up(M, tm)
    nm = Mp // tm
    no = 2 if (nm % 2 == 0 and nm >= 2) else 1                 # outer 'parallel' split (v7x)
    ni = nm // no

    # ---- combined real/imag NHWC input (bf16), zero-padded for "full" correlation ------
    x_comb = jnp.concatenate([x[..., 0], x[..., 1]], axis=1)            # (N, 2Cin, H, W)
    x_comb = jnp.transpose(x_comb, (0, 2, 3, 1)).astype(jnp.bfloat16)   # (N, H, W, 2Cin)
    xp = jnp.pad(x_comb, ((0, 0), (K - 1, K - 1), (K - 1, K - 1), (0, 0)))

    # ---- im2col patches (bf16): (Mp, Kcp), zero-padded rows / contraction cols ---------
    cols = [xp[:, a:a + Ho, b:b + Wo, :] for a in range(K) for b in range(K)]
    patches = jnp.concatenate(cols, axis=-1).reshape(M, Kc)
    P = jnp.pad(patches, ((0, Mp - M), (0, Kcp - Kc)))

    # ---- ConvTranspose weights: spatial flip, complex -> real block matrix, padded -----
    wre_t = jnp.transpose(jnp.flip(w_re, axis=(2, 3)), (2, 3, 0, 1))    # (K, K, Cin, Cout)
    wim_t = jnp.transpose(jnp.flip(w_im, axis=(2, 3)), (2, 3, 0, 1))
    top = jnp.concatenate([wre_t, wim_t], axis=-1)      # x_re -> [out_re | out_im]
    bot = jnp.concatenate([-wim_t, wre_t], axis=-1)     # x_im -> [out_re | out_im]
    wcomb = jnp.concatenate([top, bot], axis=2).reshape(Kc, C2).astype(jnp.bfloat16)
    W2 = jnp.pad(wcomb, ((0, Kcp - Kc), (0, Cp - C2)))

    # ---- per-channel parameters, lane-padded with zeros --------------------------------
    bias_p = jnp.zeros((Cp,), jnp.float32).at[:C2].set(
        jnp.concatenate([b_re - b_im, b_re + b_im]))
    gamma_p = jnp.zeros((Cp,), jnp.float32).at[:C2].set(jnp.concatenate([gamma, gamma]))
    beta_p = jnp.zeros((Cp,), jnp.float32).at[:C2].set(jnp.concatenate([beta, beta]))

    cparams_pass1 = pltpu.CompilerParams(
        dimension_semantics=("parallel", "arbitrary"), vmem_limit_bytes=_VMEM_LIMIT)
    cparams_par = pltpu.CompilerParams(
        dimension_semantics=("parallel",), vmem_limit_bytes=_VMEM_LIMIT)

    if not last_layer:
        # ---- pass 1: conv matmul (single P read) + exact per-channel sums --------------
        p_spec = pl.BlockSpec((tm, Kcp), lambda o, i: (o * ni + i, 0))
        w_spec = pl.BlockSpec((Kcp, Cp), lambda o, i: (0, 0))           # resident weights
        y_spec = pl.BlockSpec((tm, Cp), lambda o, i: (o * ni + i, 0))
        sums_spec = pl.BlockSpec((8, Cp), lambda o, i: (o, 0))          # resident partials

        y_flat, sums = pl.pallas_call(
            _conv_stats_kernel,
            out_shape=(jax.ShapeDtypeStruct((Mp, Cp), jnp.bfloat16),
                       jax.ShapeDtypeStruct((no * 8, Cp), jnp.float32)),
            grid=(no, ni),
            in_specs=[p_spec, w_spec],
            out_specs=(y_spec, sums_spec),
            compiler_params=cparams_pass1,
        )(P, W2)

        # Padded (zero) rows contribute exactly 0 to both sums -> divide by the true M.
        # (f32 sum-of-squares is fine at these M; switch to two-pass var if M ~ 1e7+.)
        tot = sums.reshape(no, 8, Cp).sum(axis=0)
        mean_y = tot[0] / M
        var_y = jnp.maximum(tot[1] / M - mean_y * mean_y, 0.0)   # biased var (training BN)
        inv_std = jax.lax.rsqrt(var_y + 1e-5)
        A = gamma_p * inv_std
        B = beta_p - mean_y * A       # conv bias cancels inside BatchNorm (bug fixed)
        prm = jnp.zeros((8, Cp), jnp.float32).at[0].set(A).at[1].set(B)

        # ---- pass 2: elementwise fused affine + LeakyReLU, fully parallel over M tiles -
        out_flat = pl.pallas_call(
            functools.partial(_affine_act_kernel, slope=0.01),
            out_shape=jax.ShapeDtypeStruct((Mp, Cp), jnp.bfloat16),
            grid=(nm,),
            in_specs=[pl.BlockSpec((tm, Cp), lambda m: (m, 0)),
                      pl.BlockSpec((8, Cp), lambda m: (0, 0))],
            out_specs=pl.BlockSpec((tm, Cp), lambda m: (m, 0)),
            compiler_params=cparams_par,
        )(y_flat, prm)
    else:
        # ---- single fused pass: conv matmul + bias + tanh (phase * magnitude) ----------
        prm = jnp.zeros((8, Cp), jnp.float32).at[1].set(bias_p)
        out_flat = pl.pallas_call(
            _conv_tanh_kernel,
            out_shape=jax.ShapeDtypeStruct((Mp, Cp), jnp.bfloat16),
            grid=(nm,),
            in_specs=[pl.BlockSpec((tm, Kcp), lambda m: (m, 0)),
                      pl.BlockSpec((Kcp, Cp), lambda m: (0, 0)),
                      pl.BlockSpec((8, Cp), lambda m: (0, 0))],
            out_specs=pl.BlockSpec((tm, Cp), lambda m: (m, 0)),
            compiler_params=cparams_par,
        )(P, W2, prm)

    # ---- back to the PyTorch layout (N, Cout, Ho, Wo, 2), f32 --------------------------
    out = out_flat[:M, :C2].astype(jnp.float32).reshape(N, Ho, Wo, C2)
    out_re = jnp.transpose(out[..., :Cout], (0, 3, 1, 2))
    out_im = jnp.transpose(out[..., Cout:], (0, 3, 1, 2))
    return jnp.stack([out_re, out_im], axis=-1)


# ----------------------------------------------------------------------------
# Pure-numpy reference of the PyTorch forward (for correctness checking)
# ----------------------------------------------------------------------------
def _ref_convtrans(x, w, b):
    N, Cin, H, W = x.shape
    _, Cout, K, _ = w.shape
    out = np.zeros((N, Cout, H + K - 1, W + K - 1), np.float32)
    for n in range(N):
        for c in range(Cin):
            for i in range(H):
                for j in range(W):
                    out[n, :, i:i + K, j:j + K] += x[n, c, i, j] * w[c]
    return out + b[None, :, None, None]


def _ref_forward(x, w_re, w_im, b_re, b_im, gamma, beta, last_layer=False):
    x_re, x_im = x[..., 0], x[..., 1]
    out_re = _ref_convtrans(x_re, w_re, b_re) - _ref_convtrans(x_im, w_im, b_im)
    out_im = _ref_convtrans(x_im, w_re, b_re) + _ref_convtrans(x_re, w_im, b_im)
    if last_layer:
        conved = np.stack([out_re, out_im], -1)
        a = np.abs(conved)
        return conved / (a + 1e-8) * np.tanh(a)

    def bn(y):
        mean = y.mean(axis=(0, 2, 3), keepdims=True)
        var = y.var(axis=(0, 2, 3), keepdims=True)   # biased, training mode
        return ((y - mean) / np.sqrt(var + 1e-5)
                * gamma[None, :, None, None] + beta[None, :, None, None])

    normed = np.stack([bn(out_re), bn(out_im)], -1)
    return np.where(normed >= 0, normed, 0.01 * normed)


# ----------------------------------------------------------------------------
if __name__ == "__main__":
    N, Cin, Cout, H, W, K = 2, 4, 8, 16, 16, 3

    key = jax.random.PRNGKey(0)
    k_wre, k_wim, k_bre, k_bim, k_g, k_b, k_x = jax.random.split(key, 7)

    limit = float(np.sqrt(6.0 / ((Cin + Cout) * K * K)))   # Xavier-uniform-like init
    w_re = jax.random.uniform(k_wre, (Cin, Cout, K, K), jnp.float32, -limit, limit)
    w_im = jax.random.uniform(k_wim, (Cin, Cout, K, K), jnp.float32, -limit, limit)
    b_re = jax.random.uniform(k_bre, (Cout,), jnp.float32, -0.1, 0.1)
    b_im = jax.random.uniform(k_bim, (Cout,), jnp.float32, -0.1, 0.1)
    gamma = jax.random.uniform(k_g, (Cout,), jnp.float32, 0.5, 1.5)
    beta = jax.random.uniform(k_b, (Cout,), jnp.float32, -0.5, 0.5)
    x = jax.random.normal(k_x, (N, Cin, H, W, 2), jnp.float32)

    xn, wren, wimn = np.asarray(x), np.asarray(w_re), np.asarray(w_im)
    bren, bimn = np.asarray(b_re), np.asarray(b_im)
    gn, ben = np.asarray(gamma), np.asarray(beta)

    # Tolerances reflect bf16 matmul operands + bf16 intermediate/output storage
    # (accumulation / statistics in f32).
    TOL = dict(rtol=3e-2, atol=3e-2)

    # 1) Multi-tile path (tile_m=128 -> several M-tiles, 2 partial-sum groups):
    #    exercises cross-tile / cross-partial BatchNorm statistics.
    out_a = jax.block_until_ready(
        cconv_trans_block(x, w_re, w_im, b_re, b_im, gamma, beta,
                          last_layer=False, tile_m=128))
    ref_bn = _ref_forward(xn, wren, wimn, bren, bimn, gn, ben, last_layer=False)
    assert out_a.shape == (N, Cout, H + K - 1, W + K - 1, 2), out_a.shape
    np.testing.assert_allclose(np.asarray(out_a), ref_bn, **TOL)

    # 2) Default (VMEM-budget) tile size: single M-tile at this toy size.
    out_b = jax.block_until_ready(
        cconv_trans_block(x, w_re, w_im, b_re, b_im, gamma, beta, last_layer=False))
    np.testing.assert_allclose(np.asarray(out_b), ref_bn, **TOL)

    # 3) last_layer (phase / magnitude) path, fused single pass.
    out_c = jax.block_until_ready(
        cconv_trans_block(x, w_re, w_im, b_re, b_im, gamma, beta,
                          last_layer=True, tile_m=128))
    ref_ll = _ref_forward(xn, wren, wimn, bren, bimn, gn, ben, last_layer=True)
    np.testing.assert_allclose(np.asarray(out_c), ref_ll, **TOL)

    print("KERNEL_OK")
</pallas_src>

<mosaic_0001>
module attributes {stable_mosaic.version = 11 : i64} {
  func.func @_conv_stats_kernel(%arg0: i32, %arg1: i32, %arg2: memref<128x128xbf16, #tpu.memory_space<vmem>>, %arg3: memref<128x128xbf16, #tpu.memory_space<vmem>>, %arg4: memref<128x128xbf16, #tpu.memory_space<vmem>>, %arg5: memref<8x128xf32, #tpu.memory_space<vmem>>) attributes {dimension_semantics = [#tpu.dimension_semantics<parallel>, #tpu.dimension_semantics<arbitrary>], iteration_bounds = array<i64: 2, 3>, scalar_prefetch = 0 : i64, scratch_operands = 0 : i64, tpu.core_type = #tpu.core_type<tc>, window_params = [{transform_indices = @transform_0, window_bounds = array<i64: 128, 128>}, {pipeline_mode = #tpu.pipeline_mode<synchronous>, transform_indices = @transform_1, window_bounds = array<i64: 128, 128>}, {transform_indices = @transform_2, window_bounds = array<i64: 128, 128>}, {transform_indices = @transform_3, window_bounds = array<i64: 8, 128>}]} {
    %c0_i32 = arith.constant 0 : i32
    %0 = arith.cmpi eq, %arg1, %c0_i32 : i32
    %1 = arith.extui %0 : i1 to i32
    %c0_i32_0 = arith.constant 0 : i32
    %2 = arith.cmpi ne, %1, %c0_i32_0 : i32
    scf.if %2 {
      %cst_15 = arith.constant 0.000000e+00 : f32
      %19 = vector.broadcast %cst_15 : f32 to vector<8x128xf32>
      %c0_16 = arith.constant 0 : index
      %c0_17 = arith.constant 0 : index
      %20 = vector.load %arg5[%c0_16, %c0_17] : memref<8x128xf32, #tpu.memory_space<vmem>>, vector<8x128xf32>
      tpu.vector_store %arg5[%c0_16, %c0_17], %19 {strides = array<i32>} : memref<8x128xf32, #tpu.memory_space<vmem>>, vector<8x128xf32>,
    } else {
    }
    %c0 = arith.constant 0 : index
    %c0_1 = arith.constant 0 : index
    %3 = vector.load %arg2[%c0, %c0_1] : memref<128x128xbf16, #tpu.memory_space<vmem>>, vector<128x128xbf16>
    %c0_2 = arith.constant 0 : index
    %c0_3 = arith.constant 0 : index
    %4 = vector.load %arg3[%c0_2, %c0_3] : memref<128x128xbf16, #tpu.memory_space<vmem>>, vector<128x128xbf16>
    %cst = arith.constant dense<0.000000e+00> : vector<128x128xf32>
    %5 = tpu.matmul %3, %4, %cst {dimension_numbers = #tpu.dot_dimension_numbers<[1], [0], [0], [1], [0, 0, 1, 1], [], []>} : vector<128x128xbf16>, vector<128x128xbf16>, vector<128x128xf32> -> vector<128x128xf32>
    %6 = arith.truncf %5 : vector<128x128xf32> to vector<128x128xbf16>
    %c0_4 = arith.constant 0 : index
    %c0_5 = arith.constant 0 : index
    %7 = vector.load %arg4[%c0_4, %c0_5] : memref<128x128xbf16, #tpu.memory_space<vmem>>, vector<128x128xbf16>
    tpu.vector_store %arg4[%c0_4, %c0_5], %6 {strides = array<i32>} : memref<128x128xbf16, #tpu.memory_space<vmem>>, vector<128x128xbf16>,
    %c0_6 = arith.constant 0 : index
    %c0_7 = arith.constant 0 : index
    %8 = vector.load %arg5[%c0_6, %c0_7] : memref<8x128xf32, #tpu.memory_space<vmem>>, vector<1x128xf32>
    %cst_8 = arith.constant dense<0.000000e+00> : vector<128xf32>
    %9 = vector.multi_reduction <add>, %5, %cst_8 [0] : vector<128x128xf32> to vector<128xf32>
    %10 = vector.shape_cast %9 : vector<128xf32> to vector<1x128xf32>
    %11 = arith.addf %8, %10 : vector<1x128xf32>
    %c0_9 = arith.constant 0 : index
    %c0_10 = arith.constant 0 : index
    %12 = vector.load %arg5[%c0_9, %c0_10] : memref<8x128xf32, #tpu.memory_space<vmem>>, vector<1x128xf32>
    tpu.vector_store %arg5[%c0_9, %c0_10], %11 {strides = array<i32>} : memref<8x128xf32, #tpu.memory_space<vmem>>, vector<1x128xf32>,
    %c1 = arith.constant 1 : index
    %c0_11 = arith.constant 0 : index
    %13 = vector.load %arg5[%c1, %c0_11] : memref<8x128xf32, #tpu.memory_space<vmem>>, vector<1x128xf32>
    %14 = arith.mulf %5, %5 : vector<128x128xf32>
    %cst_12 = arith.constant dense<0.000000e+00> : vector<128xf32>
    %15 = vector.multi_reduction <add>, %14, %cst_12 [0] : vector<128x128xf32> to vector<128xf32>
    %16 = vector.shape_cast %15 : vector<128xf32> to vector<1x128xf32>
    %17 = arith.addf %13, %16 : vector<1x128xf32>
    %c1_13 = arith.constant 1 : index
    %c0_14 = arith.constant 0 : index
    %18 = vector.load %arg5[%c1_13, %c0_14] : memref<8x128xf32, #tpu.memory_space<vmem>>, vector<1x128xf32>
    tpu.vector_store %arg5[%c1_13, %c0_14], %17 {strides = array<i32>} : memref<8x128xf32, #tpu.memory_space<vmem>>, vector<1x128xf32>,
    return
  }
  func.func @transform_0(%arg0: i32, %arg1: i32) -> (i32, i32) {
    %c3_i32 = arith.constant 3 : i32
    %0 = arith.muli %arg0, %c3_i32 : i32
    %1 = arith.addi %0, %arg1 : i32
    %c0_i32 = arith.constant 0 : i32
    %c0_i32_0 = arith.constant 0 : i32
    return %1, %c0_i32 : i32, i32
  }
  func.func @transform_1(%arg0: i32, %arg1: i32) -> (i32, i32) {
    %c0_i32 = arith.constant 0 : i32
    %c0_i32_0 = arith.constant 0 : i32
    %c0_i32_1 = arith.constant 0 : i32
    return %c0_i32, %c0_i32_0 : i32, i32
  }
  func.func @transform_2(%arg0: i32, %arg1: i32) -> (i32, i32) {
    %c3_i32 = arith.constant 3 : i32
    %0 = arith.muli %arg0, %c3_i32 : i32
    %1 = arith.addi %0, %arg1 : i32
    %c0_i32 = arith.constant 0 : i32
    %c0_i32_0 = arith.constant 0 : i32
    return %1, %c0_i32 : i32, i32
  }
  func.func @transform_3(%arg0: i32, %arg1: i32) -> (i32, i32) {
    %c0_i32 = arith.constant 0 : i32
    %c0_i32_0 = arith.constant 0 : i32
    return %arg0, %c0_i32 : i32, i32
  }
}

module attributes {stable_mosaic.version = 11 : i64} {
  func.func @_affine_act_kernel(%arg0: i32, %arg1: memref<128x128xbf16, #tpu.memory_space<vmem>>, %arg2: memref<8x128xf32, #tpu.memory_space<vmem>>, %arg3: memref<128x128xbf16, #tpu.memory_space<vmem>>) attributes {dimension_semantics = [#tpu.dimension_semantics<parallel>], iteration_bounds = array<i64: 6>, scalar_prefetch = 0 : i64, scratch_operands = 0 : i64, tpu.core_type = #tpu.core_type<tc>, window_params = [{transform_indices = @transform_0, window_bounds = array<i64: 128, 128>}, {pipeline_mode = #tpu.pipeline_mode<synchronous>, transform_indices = @transform_1, window_bounds = array<i64: 8, 128>}, {transform_indices = @transform_2, window_bounds = array<i64: 128, 128>}]} {
    %c0 = arith.constant 0 : index
    %c0_0 = arith.constant 0 : index
    %0 = vector.load %arg1[%c0, %c0_0] : memref<128x128xbf16, #tpu.memory_space<vmem>>, vector<128x128xbf16>
    %1 = arith.extf %0 : vector<128x128xbf16> to vector<128x128xf32>
    %c0_1 = arith.constant 0 : index
    %c0_2 = arith.constant 0 : index
    %2 = vector.load %arg2[%c0_1, %c0_2] : memref<8x128xf32, #tpu.memory_space<vmem>>, vector<1x128xf32>
    %3 = vector.broadcast %2 : vector<1x128xf32> to vector<128x128xf32>
    %4 = arith.mulf %1, %3 : vector<128x128xf32>
    %c1 = arith.constant 1 : index
    %c0_3 = arith.constant 0 : index
    %5 = vector.load %arg2[%c1, %c0_3] : memref<8x128xf32, #tpu.memory_space<vmem>>, vector<1x128xf32>
    %6 = vector.broadcast %5 : vector<1x128xf32> to vector<128x128xf32>
    %7 = arith.addf %4, %6 : vector<128x128xf32>
    %cst = arith.constant 0.000000e+00 : f32
    %8 = vector.broadcast %cst : f32 to vector<128x128xf32>
    %9 = arith.cmpf oge, %7, %8 : vector<128x128xf32>
    %cst_4 = arith.constant 0.00999999977 : f32
    %10 = vector.broadcast %cst_4 : f32 to vector<128x128xf32>
    %11 = arith.mulf %10, %7 : vector<128x128xf32>
    %12 = arith.select %9, %7, %11 : vector<128x128xi1>, vector<128x128xf32>
    %13 = arith.truncf %12 : vector<128x128xf32> to vector<128x128xbf16>
    %c0_5 = arith.constant 0 : index
    %c0_6 = arith.constant 0 : index
    %14 = vector.load %arg3[%c0_5, %c0_6] : memref<128x128xbf16, #tpu.memory_space<vmem>>, vector<128x128xbf16>
    tpu.vector_store %arg3[%c0_5, %c0_6], %13 {strides = array<i32>} : memref<128x128xbf16, #tpu.memory_space<vmem>>, vector<128x128xbf16>,
    return
  }
  func.func @transform_0(%arg0: i32) -> (i32, i32) {
    %c0_i32 = arith.constant 0 : i32
    %c0_i32_0 = arith.constant 0 : i32
    return %arg0, %c0_i32 : i32, i32
  }
  func.func @transform_1(%arg0: i32) -> (i32, i32) {
    %c0_i32 = arith.constant 0 : i32
    %c0_i32_0 = arith.constant 0 : i32
    %c0_i32_1 = arith.constant 0 : i32
    return %c0_i32, %c0_i32_0 : i32, i32
  }
  func.func @transform_2(%arg0: i32) -> (i32, i32) {
    %c0_i32 = arith.constant 0 : i32
    %c0_i32_0 = arith.constant 0 : i32
    return %arg0, %c0_i32 : i32, i32
  }
}

</mosaic_0001>

<llo_original>
// kernel: cconv_trans_block.3
$region0: #{cconv_trans_block.3}
  #allocation0 [shape = 'u32[]', space=smem, size = 0x4, offset = 0x4, fixed_abs, tag = 'smem constant byte address 0x4 - core index']
  #allocation1 [shape = 'u32[72,128]{1,0:T(1,128)}', space=vmem, size = 0x9000, scoped, tag = 'internal scratch']
  %s0 = inlined_call_operand.vmem [shape: bf16[768,128], index: 0, kind: input, shape index: {}]
  %s1 = inlined_call_operand.vmem [shape: f32[8,128], index: 1, kind: input, shape index: {}]
  %s2 = inlined_call_operand.vmem [shape: bf16[768,128], index: 2, kind: output, shape index: {}]
  %s3 = sld [smem:[#allocation0]]
  $region41: #{cconv_trans_block.3} parent=0
    _
  %s5 = ssub.s32 1, %s3
  %s6 = scalar_select 0, %s5, %s3
  loop: start=0, step=1, limit=8
  $region2: #{cconv_trans_block.3} parent=0 // loop_pre_header
    _
  $region3: #{cconv_trans_block.3} parent=0 // loop_header
    %s8 = sphi 0, %s12
    %p9 = scmp.ge.s32.totalorder %s8, 8
    %s18 = sphi 0, %s20
    %s21 = sphi 0, %s18
    %s22 = sphi 0, %s21
    %s38 = sphi 0, %s22
    %s42 = sphi 0, %s42
    %s44 = sphi 0, %s42
    %s45 = sphi 0, %s44
    %s59 = sphi 0, %s45
    %s65 = sphi 0, %s67
    %s68 = sphi 0, %s65
    %s69 = sphi 0, %s68
    %s85 = sphi 0, %s69
  $region4: #{cconv_trans_block.3} parent=0 // loop_header_branch
    %11 = sbr.rel (%p9) target = $region8
  $region5: #{cconv_trans_block.3} parent=0 // loop_body
    %s13 = ssub.s32 %s8, 1
    %s14 = ssub.s32 %s8, 2
    %s15 = sadd.s32 %s8, 1
    %s16 = ssub.s32 %s8, %s15
    %p17 = scmp.eq.s32.totalorder %s16, 0
    %s19 = sadd.s32 %s18, 1
    %s20 = scalar_select %p17, %s18, %s19
    %p23 = pneg %p17
    %p24 = scmp.eq.s32.totalorder %s8, 5
    %p25 = por %p23, %p24
    %p26 = scmp.ne.s32.totalorder %s18, %s21
    %p27 = scmp.eq.s32.totalorder %s8, 0
    %p28 = por %p26, %p27
    %p29 = scmp.ne.s32.totalorder %s18, %s21
    %p30 = scmp.eq.s32.totalorder %s13, 5
    %p31 = por %p29, %p30
    %p32 = scmp.ne.s32.totalorder %s21, %s22
    %p33 = scmp.eq.s32.totalorder %s13, 0
    %p34 = por %p32, %p33
    %p35 = scmp.ne.s32.totalorder %s21, %s22
    %p36 = scmp.eq.s32.totalorder %s14, 5
    %p37 = por %p35, %p36
    %p39 = scmp.ne.s32.totalorder %s22, %s38
    %p40 = scmp.eq.s32.totalorder %s14, 0
    %p41 = por %p39, %p40
    %s43 = sadd.s32 %s42, 1
    %p46 = scmp.eq.s32.totalorder %s8, 5
    %p47 = scmp.ne.s32.totalorder %s42, %s44
    %p48 = scmp.eq.s32.totalorder %s8, 0
    %p49 = por %p47, %p48
    %p50 = scmp.ne.s32.totalorder %s42, %s44
    %p51 = scmp.eq.s32.totalorder %s13, 5
    %p52 = por %p50, %p51
    %p53 = scmp.ne.s32.totalorder %s44, %s45
    %p54 = scmp.eq.s32.totalorder %s13, 0
    %p55 = por %p53, %p54
    %p56 = scmp.ne.s32.totalorder %s44, %s45
    %p57 = scmp.eq.s32.totalorder %s14, 5
    %p58 = por %p56, %p57
    %p60 = scmp.ne.s32.totalorder %s45, %s59
    %p61 = scmp.eq.s32.totalorder %s14, 0
    %p62 = por %p60, %p61
    %s63 = ssub.s32 %s8, %s15
    %p64 = scmp.eq.s32.totalorder %s63, 0
    %s66 = sadd.s32 %s65, 1
    %s67 = scalar_select %p64, %s65, %s66
    %p70 = pneg %p64
    %p71 = scmp.eq.s32.totalorder %s8, 5
    %p72 = por %p70, %p71
    %p73 = scmp.ne.s32.totalorder %s65, %s68
    %p74 = scmp.eq.s32.totalorder %s8, 0
    %p75 = por %p73, %p74
    %p76 = scmp.ne.s32.totalorder %s65, %s68
    %p77 = scmp.eq.s32.totalorder %s13, 5
    %p78 = por %p76, %p77
    %p79 = scmp.ne.s32.totalorder %s68, %s69
    %p80 = scmp.eq.s32.totalorder %s13, 0
    %p81 = por %p79, %p80
    %p82 = scmp.ne.s32.totalorder %s68, %s69
    %p83 = scmp.eq.s32.totalorder %s14, 5
    %p84 = por %p82, %p83
    %p86 = scmp.ne.s32.totalorder %s69, %s85
    %p87 = scmp.eq.s32.totalorder %s14, 0
    %p88 = por %p86, %p87
    %p89 = scmp.le.s32.totalorder 1, %s8
    %p90 = scmp.lt.s32.totalorder %s8, 7
    %p91 = pnand %p89, %p90
    %p92 = pneg %p91
    // Predicated region
    $region9: #{cconv_trans_block.3} parent=5 // pred_check
      _
    $region10: #{cconv_trans_block.3} parent=5 // pred_check_branch
      %94 = sbr.rel (%p91) target = $region12
    $region11: #{cconv_trans_block.3} parent=5 // pred_region
      %s95 = ssub.s32 %s8, 1
      // Predicated region
      $region13: #{cconv_trans_block.3} parent=11 // pred_check
        %p96 = pneg %p55
      $region14: #{cconv_trans_block.3} parent=11 // pred_check_branch
        %98 = sbr.rel (%p96) target = $region16
      $region15: #{cconv_trans_block.3} parent=11 // pred_region
        _
      $region16: #{cconv_trans_block.3} parent=11 // pred_fallthru
        _
    $region12: #{cconv_trans_block.3} parent=5 // pred_fallthru
      _
    %p99 = scmp.lt.s32.totalorder %s8, 6
    // Predicated region
    $region17: #{cconv_trans_block.3} parent=5 // pred_check
      %p100 = pneg %p99
    $region18: #{cconv_trans_block.3} parent=5 // pred_check_branch
      %102 = sbr.rel (%p100) target = $region20
    $region19: #{cconv_trans_block.3} parent=5 // pred_region
      // Predicated region
      $region21: #{cconv_trans_block.3} parent=19 // pred_check
        %p103 = pneg %p28
      $region22: #{cconv_trans_block.3} parent=19 // pred_check_branch
        %105 = sbr.rel (%p103) target = $region24
      $region23: #{cconv_trans_block.3} parent=19 // pred_region
        %s106 = smul.u32 16, %s8
        %p107 = scmp.lt.s32.totalorder %s106, 95
        %s108 = scalar_select %p107, %s106, 95
        %s109 = smul.addr %s108, 4
        %s110 = scalar_lea.vmem %s0, %s109
        %s111 = smul.u32 16, %s8
      $region24: #{cconv_trans_block.3} parent=19 // pred_fallthru
        _
    $region20: #{cconv_trans_block.3} parent=5 // pred_fallthru
      _
    %p112 = scmp.le.s32.totalorder 1, %s8
    %p113 = scmp.lt.s32.totalorder %s8, 7
    %p114 = pnand %p112, %p113
    %p115 = pneg %p114
    // Predicated region
    $region25: #{cconv_trans_block.3} parent=5 // pred_check
      _
    $region26: #{cconv_trans_block.3} parent=5 // pred_check_branch
      %117 = sbr.rel (%p114) target = $region28
    $region27: #{cconv_trans_block.3} parent=5 // pred_region
      %s118 = ssub.s32 %s8, 1
      %s119 = smul.u32 16, %s13
      %p120 = scmp.lt.s32.totalorder %s119, 95
      %s121 = scalar_select %p120, %s119, 95
      %s122 = smul.addr %s121, 4
      %s123 = scalar_lea.vmem %s0, %s122
      %p124 = pneg %p34
      %p125 = pneg %p31
      %p126 = pneg %p55
      %p127 = pneg %p52
      %p128 = pneg %p81
      %p129 = pneg %p78
      %s130 = smul.u32 16, %s13
      %p131 = scmp.lt.s32.totalorder %s130, 95
      %s132 = scalar_select %p131, %s130, 95
      %s133 = smul.addr %s132, 4
      %s134 = scalar_lea.vmem %s2, %s133
      %s135 = smul.u32 16, %s13
      %p136 = scmp.lt.s32.totalorder %s135, 95
      %s137 = scalar_select %p136, %s135, 95
      %s138 = smul.addr %s137, 4
      %s139 = scalar_lea.vmem %s0, %s138
      %s140 = smul.u32 16, %s13
      %s141 = smul.u32 16, %s13
      %p142 = scmp.lt.s32.totalorder %s141, 95
      %s143 = scalar_select %p142, %s141, 95
      %s144 = smul.addr %s143, 4
      %s145 = scalar_lea.vmem %s2, %s144
      %s146 = smul.u32 16, %s13
      %v147 = vld [vmem:[%s139] sm:$0xf]
      %v148 = vld [vmem:[%s139 + $0x4] sm:$0xf]
      %v149 = vld [vmem:[%s139 + $0x8] sm:$0xf]
      %v150 = vld [vmem:[%s139 + $0xc] sm:$0xf]
      %v151 = vld [vmem:[%s139 + $0x10] sm:$0xf]
      %v152 = vld [vmem:[%s139 + $0x14] sm:$0xf]
      %v153 = vld [vmem:[%s139 + $0x18] sm:$0xf]
      %v154 = vld [vmem:[%s139 + $0x1c] sm:$0xf]
      %v155 = vld [vmem:[%s139 + $0x20] sm:$0xf]
      %v156 = vld [vmem:[%s139 + $0x24] sm:$0xf]
      %v157 = vld [vmem:[%s139 + $0x28] sm:$0xf]
      %v158 = vld [vmem:[%s139 + $0x2c] sm:$0xf]
      %v159 = vld [vmem:[%s139 + $0x30] sm:$0xf]
      %v160 = vld [vmem:[%s139 + $0x34] sm:$0xf]
      %v161 = vld [vmem:[%s139 + $0x38] sm:$0xf]
      %v162 = vld [vmem:[%s139 + $0x3c] sm:$0xf]
      %v163 = vunpack.c.l.bf16 %v147
      %v164 = vunpack.c.l.bf16 %v148
      %v165 = vunpack.c.l.bf16 %v149
      %v166 = vunpack.c.l.bf16 %v150
      %v167 = vunpack.c.l.bf16 %v151
      %v168 = vunpack.c.l.bf16 %v152
      %v169 = vunpack.c.l.bf16 %v153
      %v170 = vunpack.c.l.bf16 %v154
      %v171 = vunpack.c.l.bf16 %v155
      %v172 = vunpack.c.l.bf16 %v156
      %v173 = vunpack.c.l.bf16 %v157
      %v174 = vunpack.c.l.bf16 %v158
      %v175 = vunpack.c.l.bf16 %v159
      %v176 = vunpack.c.l.bf16 %v160
      %v177 = vunpack.c.l.bf16 %v161
      %v178 = vunpack.c.l.bf16 %v162
      %v179 = vld [vmem:[%s1] sm:$0x1]
      %v180 = vperm.slane %v179, 0
      %v181 = vmul.f32 %v163, %v180
      %v182 = vmul.f32 %v164, %v180
      %v183 = vmul.f32 %v165, %v180
      %v184 = vmul.f32 %v166, %v180
      %v185 = vmul.f32 %v167, %v180
      %v186 = vmul.f32 %v168, %v180
      %v187 = vmul.f32 %v169, %v180
      %v188 = vmul.f32 %v170, %v180
      %v189 = vmul.f32 %v171, %v180
      %v190 = vmul.f32 %v172, %v180
      %v191 = vmul.f32 %v173, %v180
      %v192 = vmul.f32 %v174, %v180
      %v193 = vmul.f32 %v175, %v180
      %v194 = vmul.f32 %v176, %v180
      %v195 = vmul.f32 %v177, %v180
      %v196 = vmul.f32 %v178, %v180
      %v197 = vld [vmem:[%s1 + $0x1] sm:$0x1]
      %v198 = vperm.slane %v197, 0
      %v199 = vadd.f32 %v181, %v198
      %v200 = vadd.f32 %v182, %v198
      %v201 = vadd.f32 %v183, %v198
      %v202 = vadd.f32 %v184, %v198
      %v203 = vadd.f32 %v185, %v198
      %v204 = vadd.f32 %v186, %v198
      %v205 = vadd.f32 %v187, %v198
      %v206 = vadd.f32 %v188, %v198
      %v207 = vadd.f32 %v189, %v198
      %v208 = vadd.f32 %v190, %v198
      %v209 = vadd.f32 %v191, %v198
      %v210 = vadd.f32 %v192, %v198
      %v211 = vadd.f32 %v193, %v198
      %v212 = vadd.f32 %v194, %v198
      %v213 = vadd.f32 %v195, %v198
      %v214 = vadd.f32 %v196, %v198
      %vm215 = vcmp.ge.f32.partialorder %v199, 0.0
      %vm216 = vcmp.ge.f32.partialorder %v200, 0.0
      %vm217 = vcmp.ge.f32.partialorder %v201, 0.0
      %vm218 = vcmp.ge.f32.partialorder %v202, 0.0
      %vm219 = vcmp.ge.f32.partialorder %v203, 0.0
      %vm220 = vcmp.ge.f32.partialorder %v204, 0.0
      %vm221 = vcmp.ge.f32.partialorder %v205, 0.0
      %vm222 = vcmp.ge.f32.partialorder %v206, 0.0
      %vm223 = vcmp.ge.f32.partialorder %v207, 0.0
      %vm224 = vcmp.ge.f32.partialorder %v208, 0.0
      %vm225 = vcmp.ge.f32.partialorder %v209, 0.0
      %vm226 = vcmp.ge.f32.partialorder %v210, 0.0
      %vm227 = vcmp.ge.f32.partialorder %v211, 0.0
      %vm228 = vcmp.ge.f32.partialorder %v212, 0.0
      %vm229 = vcmp.ge.f32.partialorder %v213, 0.0
      %vm230 = vcmp.ge.f32.partialorder %v214, 0.0
      %v231 = vmul.f32 %v199, 0.01
      %v232 = vmul.f32 %v200, 0.01
      %v233 = vmul.f32 %v201, 0.01
      %v234 = vmul.f32 %v202, 0.01
      %v235 = vmul.f32 %v203, 0.01
      %v236 = vmul.f32 %v204, 0.01
      %v237 = vmul.f32 %v205, 0.01
      %v238 = vmul.f32 %v206, 0.01
      %v239 = vmul.f32 %v207, 0.01
      %v240 = vmul.f32 %v208, 0.01
      %v241 = vmul.f32 %v209, 0.01
      %v242 = vmul.f32 %v210, 0.01
      %v243 = vmul.f32 %v211, 0.01
      %v244 = vmul.f32 %v212, 0.01
      %v245 = vmul.f32 %v213, 0.01
      %v246 = vmul.f32 %v214, 0.01
      %v247 = vsel %vm215, %v199, %v231
      %v248 = vsel %vm216, %v200, %v232
      %v249 = vsel %vm217, %v201, %v233
      %v250 = vsel %vm218, %v202, %v234
      %v251 = vsel %vm219, %v203, %v235
      %v252 = vsel %vm220, %v204, %v236
      %v253 = vsel %vm221, %v205, %v237
      %v254 = vsel %vm222, %v206, %v238
      %v255 = vsel %vm223, %v207, %v239
      %v256 = vsel %vm224, %v208, %v240
      %v257 = vsel %vm225, %v209, %v241
      %v258 = vsel %vm226, %v210, %v242
      %v259 = vsel %vm227, %v211, %v243
      %v260 = vsel %vm228, %v212, %v244
      %v261 = vsel %vm229, %v213, %v245
      %v262 = vsel %vm230, %v214, %v246
      %v263 = vpack.c.bf16 %v247, %v247
      %v264 = vpack.c.bf16 %v248, %v248
      %v265 = vpack.c.bf16 %v249, %v249
      %v266 = vpack.c.bf16 %v250, %v250
      %v267 = vpack.c.bf16 %v251, %v251
      %v268 = vpack.c.bf16 %v252, %v252
      %v269 = vpack.c.bf16 %v253, %v253
      %v270 = vpack.c.bf16 %v254, %v254
      %v271 = vpack.c.bf16 %v255, %v255
      %v272 = vpack.c.bf16 %v256, %v256
      %v273 = vpack.c.bf16 %v257, %v257
      %v274 = vpack.c.bf16 %v258, %v258
      %v275 = vpack.c.bf16 %v259, %v259
      %v276 = vpack.c.bf16 %v260, %v260
      %v277 = vpack.c.bf16 %v261, %v261
      %v278 = vpack.c.bf16 %v262, %v262
      %279 = vst [vmem:[%s145] sm:$0xf] %v263
      %280 = vst [vmem:[%s145 + $0x4] sm:$0xf] %v264
      %281 = vst [vmem:[%s145 + $0x8] sm:$0xf] %v265
      %282 = vst [vmem:[%s145 + $0xc] sm:$0xf] %v266
      %283 = vst [vmem:[%s145 + $0x10] sm:$0xf] %v267
      %284 = vst [vmem:[%s145 + $0x14] sm:$0xf] %v268
      %285 = vst [vmem:[%s145 + $0x18] sm:$0xf] %v269
      %286 = vst [vmem:[%s145 + $0x1c] sm:$0xf] %v270
      %287 = vst [vmem:[%s145 + $0x20] sm:$0xf] %v271
      %288 = vst [vmem:[%s145 + $0x24] sm:$0xf] %v272
      %289 = vst [vmem:[%s145 + $0x28] sm:$0xf] %v273
      %290 = vst [vmem:[%s145 + $0x2c] sm:$0xf] %v274
      %291 = vst [vmem:[%s145 + $0x30] sm:$0xf] %v275
      %292 = vst [vmem:[%s145 + $0x34] sm:$0xf] %v276
      %293 = vst [vmem:[%s145 + $0x38] sm:$0xf] %v277
      %294 = vst [vmem:[%s145 + $0x3c] sm:$0xf] %v278
      %s295 = smul.u32 16, %s13
      %p296 = scmp.lt.s32.totalorder %s295, 95
      %s297 = scalar_select %p296, %s295, 95
      %s298 = smul.addr %s297, 4
      %s299 = scalar_lea.vmem %s2, %s298
      // Predicated region
      $region29: #{cconv_trans_block.3} parent=27 // pred_check
        %p300 = pneg %p78
      $region30: #{cconv_trans_block.3} parent=27 // pred_check_branch
        %302 = sbr.rel (%p300) target = $region32
      $region31: #{cconv_trans_block.3} parent=27 // pred_region
        %s303 = smul.u32 16, %s13
      $region32: #{cconv_trans_block.3} parent=27 // pred_fallthru
        _
    $region28: #{cconv_trans_block.3} parent=5 // pred_fallthru
      _
    %p304 = scmp.le.s32.totalorder 2, %s8
    // Predicated region
    $region33: #{cconv_trans_block.3} parent=5 // pred_check
      %p305 = pneg %p304
    $region34: #{cconv_trans_block.3} parent=5 // pred_check_branch
      %307 = sbr.rel (%p305) target = $region36
    $region35: #{cconv_trans_block.3} parent=5 // pred_region
      %s308 = ssub.s32 %s8, 2
      // Predicated region
      $region37: #{cconv_trans_block.3} parent=35 // pred_check
        %p309 = pneg %p84
      $region38: #{cconv_trans_block.3} parent=35 // pred_check_branch
        %311 = sbr.rel (%p309) target = $region40
      $region39: #{cconv_trans_block.3} parent=35 // pred_region
        %s312 = smul.u32 16, %s14
        %p313 = scmp.lt.s32.totalorder %s312, 95
        %s314 = scalar_select %p313, %s312, 95
        %s315 = smul.addr %s314, 4
        %s316 = scalar_lea.vmem %s2, %s315
      $region40: #{cconv_trans_block.3} parent=35 // pred_fallthru
        _
    $region36: #{cconv_trans_block.3} parent=5 // pred_fallthru
      _
  $region6: #{cconv_trans_block.3} parent=0 // loop_footer
    %s12 = sadd.s32 1, %s8
  $region7: #{cconv_trans_block.3} parent=0 // loop_footer_branch
    %7 = sbr.rel target = $region3
  $region8: #{cconv_trans_block.3} parent=0 // loop_exit
    _

// kernel: cconv_trans_block.2
$region0: #{cconv_trans_block.2}
  #allocation0 [shape = 'u32[]', space=smem, size = 0x4, offset = 0x4, fixed_abs, tag = 'smem constant byte address 0x4 - core index']
  #allocation1 [shape = 'u32[72,128]{1,0:T(1,128)}', space=vmem, size = 0x9000, scoped, tag = 'internal scratch']
  %s0 = inlined_call_operand.vmem [shape: bf16[768,128], index: 0, kind: input, shape index: {}]
  %s1 = inlined_call_operand.vmem [shape: bf16[128,128], index: 1, kind: input, shape index: {}]
  %s2 = inlined_call_operand.vmem [shape: bf16[768,128], index: 2, kind: output, shape index: {0}]
  %s3 = inlined_call_operand.vmem [shape: f32[16,128], index: 3, kind: output, shape index: {1}]
  %4 = xla_tuple %s2, %s3
  %s5 = sld [smem:[#allocation0]]
  $region53: #{cconv_trans_block.2} parent=0
    _
  %s7 = ssub.s32 1, %s5
  %s8 = scalar_select 0, %s7, %s5
  loop: start=0, step=1, limit=8
  $region2: #{cconv_trans_block.2} parent=0 // loop_pre_header
    _
  $region3: #{cconv_trans_block.2} parent=0 // loop_header
    %s10 = sphi 0, %s14
    %p11 = scmp.ge.s32.totalorder %s10, 8
    %s17 = sphi 0, %s29
    %s18 = sphi 0, %s25
    %s19 = sphi 0, %s17
    %s20 = sphi 0, %s18
    %s21 = sphi 0, %s19
    %s22 = sphi 0, %s20
    %s36 = sphi 0, %s38
    %s39 = sphi 0, %s36
    %s40 = sphi 0, %s39
    %s56 = sphi 0, %s40
    %s60 = sphi 0, %s60
    %s62 = sphi 0, %s60
    %s63 = sphi 0, %s62
    %s77 = sphi 0, %s63
    %s87 = sphi 0, %s89
    %s90 = sphi 0, %s87
    %s91 = sphi 0, %s90
    %s107 = sphi 0, %s91
    %s113 = sphi 0, %s115
    %s116 = sphi 0, %s113
    %s117 = sphi 0, %s116
    %s133 = sphi 0, %s117
  $region4: #{cconv_trans_block.2} parent=0 // loop_header_branch
    %13 = sbr.rel (%p11) target = $region8
  $region5: #{cconv_trans_block.2} parent=0 // loop_body
    %s15 = ssub.s32 %s10, 1
    %s16 = ssub.s32 %s10, 2
    %s23 = sadd.s32 1, %s18
    %p24 = scmp.ge.s32.totalorder %s23, 3
    %s25 = scalar_select %p24, 0, %s23
    %s26 = sadd.s32 1, %s17
    %s27 = scalar_select %p24, %s26, %s17
    %p28 = scmp.ge.s32.totalorder %s27, 2
    %s29 = scalar_select %p28, 0, %s27
    %s30 = smul.u32 %s17, 3
    %s31 = sadd.s32 %s30, %s18
    %s32 = smul.u32 %s29, 3
    %s33 = sadd.s32 %s32, %s25
    %s34 = ssub.s32 %s31, %s33
    %p35 = scmp.eq.s32.totalorder %s34, 0
    %s37 = sadd.s32 %s36, 1
    %s38 = scalar_select %p35, %s36, %s37
    %p41 = pneg %p35
    %p42 = scmp.eq.s32.totalorder %s10, 5
    %p43 = por %p41, %p42
    %p44 = scmp.ne.s32.totalorder %s36, %s39
    %p45 = scmp.eq.s32.totalorder %s10, 0
    %p46 = por %p44, %p45
    %p47 = scmp.ne.s32.totalorder %s36, %s39
    %p48 = scmp.eq.s32.totalorder %s15, 5
    %p49 = por %p47, %p48
    %p50 = scmp.ne.s32.totalorder %s39, %s40
    %p51 = scmp.eq.s32.totalorder %s15, 0
    %p52 = por %p50, %p51
    %p53 = scmp.ne.s32.totalorder %s39, %s40
    %p54 = scmp.eq.s32.totalorder %s16, 5
    %p55 = por %p53, %p54
    %p57 = scmp.ne.s32.totalorder %s40, %s56
    %p58 = scmp.eq.s32.totalorder %s16, 0
    %p59 = por %p57, %p58
    %s61 = sadd.s32 %s60, 1
    %p64 = scmp.eq.s32.totalorder %s10, 5
    %p65 = scmp.ne.s32.totalorder %s60, %s62
    %p66 = scmp.eq.s32.totalorder %s10, 0
    %p67 = por %p65, %p66
    %p68 = scmp.ne.s32.totalorder %s60, %s62
    %p69 = scmp.eq.s32.totalorder %s15, 5
    %p70 = por %p68, %p69
    %p71 = scmp.ne.s32.totalorder %s62, %s63
    %p72 = scmp.eq.s32.totalorder %s15, 0
    %p73 = por %p71, %p72
    %p74 = scmp.ne.s32.totalorder %s62, %s63
    %p75 = scmp.eq.s32.totalorder %s16, 5
    %p76 = por %p74, %p75
    %p78 = scmp.ne.s32.totalorder %s63, %s77
    %p79 = scmp.eq.s32.totalorder %s16, 0
    %p80 = por %p78, %p79
    %s81 = smul.u32 %s17, 3
    %s82 = sadd.s32 %s81, %s18
    %s83 = smul.u32 %s29, 3
    %s84 = sadd.s32 %s83, %s25
    %s85 = ssub.s32 %s82, %s84
    %p86 = scmp.eq.s32.totalorder %s85, 0
    %s88 = sadd.s32 %s87, 1
    %s89 = scalar_select %p86, %s87, %s88
    %p92 = pneg %p86
    %p93 = scmp.eq.s32.totalorder %s10, 5
    %p94 = por %p92, %p93
    %p95 = scmp.ne.s32.totalorder %s87, %s90
    %p96 = scmp.eq.s32.totalorder %s10, 0
    %p97 = por %p95, %p96
    %p98 = scmp.ne.s32.totalorder %s87, %s90
    %p99 = scmp.eq.s32.totalorder %s15, 5
    %p100 = por %p98, %p99
    %p101 = scmp.ne.s32.totalorder %s90, %s91
    %p102 = scmp.eq.s32.totalorder %s15, 0
    %p103 = por %p101, %p102
    %p104 = scmp.ne.s32.totalorder %s90, %s91
    %p105 = scmp.eq.s32.totalorder %s16, 5
    %p106 = por %p104, %p105
    %p108 = scmp.ne.s32.totalorder %s91, %s107
    %p109 = scmp.eq.s32.totalorder %s16, 0
    %p110 = por %p108, %p109
    %s111 = ssub.s32 %s17, %s29
    %p112 = scmp.eq.s32.totalorder %s111, 0
    %s114 = sadd.s32 %s113, 1
    %s115 = scalar_select %p112, %s113, %s114
    %p118 = pneg %p112
    %p119 = scmp.eq.s32.totalorder %s10, 5
    %p120 = por %p118, %p119
    %p121 = scmp.ne.s32.totalorder %s113, %s116
    %p122 = scmp.eq.s32.totalorder %s10, 0
    %p123 = por %p121, %p122
    %p124 = scmp.ne.s32.totalorder %s113, %s116
    %p125 = scmp.eq.s32.totalorder %s15, 5
    %p126 = por %p124, %p125
    %p127 = scmp.ne.s32.totalorder %s116, %s117
    %p128 = scmp.eq.s32.totalorder %s15, 0
    %p129 = por %p127, %p128
    %p130 = scmp.ne.s32.totalorder %s116, %s117
    %p131 = scmp.eq.s32.totalorder %s16, 5
    %p132 = por %p130, %p131
    %p134 = scmp.ne.s32.totalorder %s117, %s133
    %p135 = scmp.eq.s32.totalorder %s16, 0
    %p136 = por %p134, %p135
    %p137 = scmp.le.s32.totalorder 1, %s10
    %p138 = scmp.lt.s32.totalorder %s10, 7
    %p139 = pnand %p137, %p138
    %p140 = pneg %p139
    // Predicated region
    $region9: #{cconv_trans_block.2} parent=5 // pred_check
      _
    $region10: #{cconv_trans_block.2} parent=5 // pred_check_branch
      %142 = sbr.rel (%p139) target = $region12
    $region11: #{cconv_trans_block.2} parent=5 // pred_region
      %s143 = ssub.s32 %s10, 1
      // Predicated region
      $region13: #{cconv_trans_block.2} parent=11 // pred_check
        %p144 = pneg %p73
      $region14: #{cconv_trans_block.2} parent=11 // pred_check_branch
        %146 = sbr.rel (%p144) target = $region16
      $region15: #{cconv_trans_block.2} parent=11 // pred_region
        _
      $region16: #{cconv_trans_block.2} parent=11 // pred_fallthru
        _
    $region12: #{cconv_trans_block.2} parent=5 // pred_fallthru
      _
    %p147 = scmp.lt.s32.totalorder %s10, 6
    // Predicated region
    $region17: #{cconv_trans_block.2} parent=5 // pred_check
      %p148 = pneg %p147
    $region18: #{cconv_trans_block.2} parent=5 // pred_check_branch
      %150 = sbr.rel (%p148) target = $region20
    $region19: #{cconv_trans_block.2} parent=5 // pred_region
      // Predicated region
      $region21: #{cconv_trans_block.2} parent=19 // pred_check
        %p151 = pneg %p46
      $region22: #{cconv_trans_block.2} parent=19 // pred_check_branch
        %153 = sbr.rel (%p151) target = $region24
      $region23: #{cconv_trans_block.2} parent=19 // pred_region
        %s154 = smul.u32 %s17, 3
        %s155 = sadd.s32 %s154, %s18
        %s156 = smul.u32 16, %s155
        %p157 = scmp.lt.s32.totalorder %s156, 95
        %s158 = scalar_select %p157, %s156, 95
        %s159 = smul.addr %s158, 4
        %s160 = scalar_lea.vmem %s0, %s159
        %s161 = smul.u32 %s17, 3
        %s162 = sadd.s32 %s161, %s18
        %s163 = smul.u32 16, %s162
      $region24: #{cconv_trans_block.2} parent=19 // pred_fallthru
        _
    $region20: #{cconv_trans_block.2} parent=5 // pred_fallthru
      _
    %p164 = scmp.le.s32.totalorder 1, %s10
    %p165 = scmp.lt.s32.totalorder %s10, 7
    %p166 = pnand %p164, %p165
    %p167 = pneg %p166
    // Predicated region
    $region25: #{cconv_trans_block.2} parent=5 // pred_check
      _
    $region26: #{cconv_trans_block.2} parent=5 // pred_check_branch
      %169 = sbr.rel (%p166) target = $region28
    $region27: #{cconv_trans_block.2} parent=5 // pred_region
      %s170 = ssub.s32 %s10, 1
      %s171 = smul.u32 %s19, 3
      %s172 = sadd.s32 %s171, %s20
      %s173 = smul.u32 16, %s172
      %p174 = scmp.lt.s32.totalorder %s173, 95
      %s175 = scalar_select %p174, %s173, 95
      %s176 = smul.addr %s175, 4
      %s177 = scalar_lea.vmem %s0, %s176
      %p178 = pneg %p52
      %p179 = pneg %p49
      %p180 = pneg %p73
      %p181 = pneg %p70
      %p182 = pneg %p103
      %p183 = pneg %p100
      %s184 = smul.u32 %s19, 3
      %s185 = sadd.s32 %s184, %s20
      %s186 = smul.u32 16, %s185
      %p187 = scmp.lt.s32.totalorder %s186, 95
      %s188 = scalar_select %p187, %s186, 95
      %s189 = smul.addr %s188, 4
      %s190 = scalar_lea.vmem %s2, %s189
      %p191 = pneg %p129
      %p192 = pneg %p126
      %p193 = scmp.lt.s32.totalorder %s19, 1
      %s194 = scalar_select %p193, %s19, 1
      %s195 = smul.addr %s194, 8
      %s196 = scalar_lea.vmem %s3, %s195
      %s197 = smul.u32 %s19, 3
      %s198 = sadd.s32 %s197, %s20
      %s199 = smul.u32 16, %s198
      %p200 = scmp.lt.s32.totalorder %s199, 95
      %s201 = scalar_select %p200, %s199, 95
      %s202 = smul.addr %s201, 4
      %s203 = scalar_lea.vmem %s0, %s202
      %s204 = smul.u32 %s19, 3
      %s205 = sadd.s32 %s204, %s20
      %s206 = smul.u32 16, %s205
      %s207 = smul.u32 %s19, 3
      %s208 = sadd.s32 %s207, %s20
      %s209 = smul.u32 16, %s208
      %p210 = scmp.lt.s32.totalorder %s209, 95
      %s211 = scalar_select %p210, %s209, 95
      %s212 = smul.addr %s211, 4
      %s213 = scalar_lea.vmem %s2, %s212
      %s214 = smul.u32 %s19, 3
      %s215 = sadd.s32 %s214, %s20
      %s216 = smul.u32 16, %s215
      %p217 = scmp.lt.s32.totalorder %s19, 1
      %s218 = scalar_select %p217, %s19, 1
      %s219 = smul.addr %s218, 8
      %s220 = scalar_lea.vmem %s3, %s219
      %p221 = scmp.eq.s32.totalorder %s20, 0
      // Predicated region
      $region29: #{cconv_trans_block.2} parent=27 // pred_check
        %p222 = pneg %p221
      $region30: #{cconv_trans_block.2} parent=27 // pred_check_branch
        %224 = sbr.rel (%p222) target = $region32
      $region31: #{cconv_trans_block.2} parent=27 // pred_region
        %225 = vst [vmem:[%s220] sm:$0xff] 0.0
      $region32: #{cconv_trans_block.2} parent=27 // pred_fallthru
        _
      %v226 = vld [vmem:[%s203] sm:$0xf]
      %v227 = vld [vmem:[%s203 + $0x4] sm:$0xf]
      %v228 = vld [vmem:[%s203 + $0x8] sm:$0xf]
      %v229 = vld [vmem:[%s203 + $0xc] sm:$0xf]
      %v230 = vld [vmem:[%s203 + $0x10] sm:$0xf]
      %v231 = vld [vmem:[%s203 + $0x14] sm:$0xf]
      %v232 = vld [vmem:[%s203 + $0x18] sm:$0xf]
      %v233 = vld [vmem:[%s203 + $0x1c] sm:$0xf]
      %v234 = vld [vmem:[%s203 + $0x20] sm:$0xf]
      %v235 = vld [vmem:[%s203 + $0x24] sm:$0xf]
      %v236 = vld [vmem:[%s203 + $0x28] sm:$0xf]
      %v237 = vld [vmem:[%s203 + $0x2c] sm:$0xf]
      %v238 = vld [vmem:[%s203 + $0x30] sm:$0xf]
      %v239 = vld [vmem:[%s203 + $0x34] sm:$0xf]
      %v240 = vld [vmem:[%s203 + $0x38] sm:$0xf]
      %v241 = vld [vmem:[%s203 + $0x3c] sm:$0xf]
      %v242 = vld [vmem:[%s1] sm:$0xf]
      %v243 = vld [vmem:[%s1 + $0x4] sm:$0xf]
      %v244 = vld [vmem:[%s1 + $0x8] sm:$0xf]
      %v245 = vld [vmem:[%s1 + $0xc] sm:$0xf]
      %v246 = vld [vmem:[%s1 + $0x10] sm:$0xf]
      %v247 = vld [vmem:[%s1 + $0x14] sm:$0xf]
      %v248 = vld [vmem:[%s1 + $0x18] sm:$0xf]
      %v249 = vld [vmem:[%s1 + $0x1c] sm:$0xf]
      %v250 = vld [vmem:[%s1 + $0x20] sm:$0xf]
      %v251 = vld [vmem:[%s1 + $0x24] sm:$0xf]
      %v252 = vld [vmem:[%s1 + $0x28] sm:$0xf]
      %v253 = vld [vmem:[%s1 + $0x2c] sm:$0xf]
      %v254 = vld [vmem:[%s1 + $0x30] sm:$0xf]
      %v255 = vld [vmem:[%s1 + $0x34] sm:$0xf]
      %v256 = vld [vmem:[%s1 + $0x38] sm:$0xf]
      %v257 = vld [vmem:[%s1 + $0x3c] sm:$0xf]
      %v274 = vunpack.c.l.b16 %v226
      %v275 = vunpack.c.l.b16 %v227
      %v276 = vunpack.c.l.b16 %v228
      %v277 = vunpack.c.l.b16 %v229
      %v278 = vunpack.c.l.b16 %v230
      %v279 = vunpack.c.l.b16 %v231
      %v280 = vunpack.c.l.b16 %v232
      %v281 = vunpack.c.l.b16 %v233
      %v282 = vunpack.c.l.b16 %v234
      %v283 = vunpack.c.l.b16 %v235
      %v284 = vunpack.c.l.b16 %v236
      %v285 = vunpack.c.l.b16 %v237
      %v286 = vunpack.c.l.b16 %v238
      %v287 = vunpack.c.l.b16 %v239
      %v288 = vunpack.c.l.b16 %v240
      %v289 = vunpack.c.l.b16 %v241
      %v290 = vpack.c.b16 %v275, %v274
      %v291 = vpack.c.b16 %v277, %v276
      %v292 = vpack.c.b16 %v279, %v278
      %v293 = vpack.c.b16 %v281, %v280
      %v294 = vpack.c.b16 %v283, %v282
      %v295 = vpack.c.b16 %v285, %v284
      %v296 = vpack.c.b16 %v287, %v286
      %v297 = vpack.c.b16 %v289, %v288
      %v322 = vunpack.c.l.b16 %v242
      %v323 = vunpack.c.l.b16 %v243
      %v324 = vunpack.c.l.b16 %v244
      %v325 = vunpack.c.l.b16 %v245
      %v326 = vunpack.c.l.b16 %v246
      %v327 = vunpack.c.l.b16 %v247
      %v328 = vunpack.c.l.b16 %v248
      %v329 = vunpack.c.l.b16 %v249
      %v330 = vunpack.c.l.b16 %v250
      %v331 = vunpack.c.l.b16 %v251
      %v332 = vunpack.c.l.b16 %v252
      %v333 = vunpack.c.l.b16 %v253
      %v334 = vunpack.c.l.b16 %v254
      %v335 = vunpack.c.l.b16 %v255
      %v336 = vunpack.c.l.b16 %v256
      %v337 = vunpack.c.l.b16 %v257
      %v338 = vpack.c.b16 %v323, %v322
      %v339 = vpack.c.b16 %v325, %v324
      %v340 = vpack.c.b16 %v327, %v326
      %v341 = vpack.c.b16 %v329, %v328
      %v342 = vpack.c.b16 %v331, %v330
      %v343 = vpack.c.b16 %v333, %v332
      %v344 = vpack.c.b16 %v335, %v334
      %v345 = vpack.c.b16 %v337, %v336
      %354 = vmatpush.bf16.msra.mxu0 %v345
      %355 = vmatpush.bf16.msra.mxu0 %v344
      %356 = vmatpush.bf16.msra.mxu0 %v343
      %357 = vmatpush.bf16.msra.mxu0 %v342
      %358 = vmatpush.bf16.msra.mxu0 %v341
      %359 = vmatpush.bf16.msra.mxu0 %v340
      %360 = vmatpush.bf16.msra.mxu0 %v339
      %361 = vmatpush.bf16.msra.mxu0 %v338
      %362 = vmatmul.bf16.gmra.mxu0 %v290
      %v363 = vpop.f32.mrf.mxu0
      %v364 = vadd.f32 0.0, %v363
      %v365 = vpop.f32.mrf.mxu0
      %v366 = vadd.f32 0.0, %v365
      %367 = vmatmul.bf16.gmra.mxu0 %v291
      %v368 = vpop.f32.mrf.mxu0
      %v369 = vadd.f32 0.0, %v368
      %v370 = vpop.f32.mrf.mxu0
      %v371 = vadd.f32 0.0, %v370
      %372 = vmatmul.bf16.gmra.mxu0 %v292
      %v373 = vpop.f32.mrf.mxu0
      %v374 = vadd.f32 0.0, %v373
      %v375 = vpop.f32.mrf.mxu0
      %v376 = vadd.f32 0.0, %v375
      %377 = vmatmul.bf16.gmra.mxu0 %v293
      %v378 = vpop.f32.mrf.mxu0
      %v379 = vadd.f32 0.0, %v378
      %v380 = vpop.f32.mrf.mxu0
      %v381 = vadd.f32 0.0, %v380
      %382 = vmatmul.bf16.gmra.mxu0 %v294
      %v383 = vpop.f32.mrf.mxu0
      %v384 = vadd.f32 0.0, %v383
      %v385 = vpop.f32.mrf.mxu0
      %v386 = vadd.f32 0.0, %v385
      %387 = vmatmul.bf16.gmra.mxu0 %v295
      %v388 = vpop.f32.mrf.mxu0
      %v389 = vadd.f32 0.0, %v388
      %v390 = vpop.f32.mrf.mxu0
      %v391 = vadd.f32 0.0, %v390
      %392 = vmatmul.bf16.gmra.mxu0 %v296
      %v393 = vpop.f32.mrf.mxu0
      %v394 = vadd.f32 0.0, %v393
      %v395 = vpop.f32.mrf.mxu0
      %v396 = vadd.f32 0.0, %v395
      %397 = vmatmul.bf16.gmra.mxu0 %v297
      %v398 = vpop.f32.mrf.mxu0
      %v399 = vadd.f32 0.0, %v398
      %v400 = vpop.f32.mrf.mxu0
      %v401 = vadd.f32 0.0, %v400
      %402 = vdwg.mxu0
      %v403 = vpack.c.bf16 %v364, %v364
      %v404 = vpack.c.bf16 %v366, %v366
      %v405 = vpack.c.bf16 %v369, %v369
      %v406 = vpack.c.bf16 %v371, %v371
      %v407 = vpack.c.bf16 %v374, %v374
      %v408 = vpack.c.bf16 %v376, %v376
      %v409 = vpack.c.bf16 %v379, %v379
      %v410 = vpack.c.bf16 %v381, %v381
      %v411 = vpack.c.bf16 %v384, %v384
      %v412 = vpack.c.bf16 %v386, %v386
      %v413 = vpack.c.bf16 %v389, %v389
      %v414 = vpack.c.bf16 %v391, %v391
      %v415 = vpack.c.bf16 %v394, %v394
      %v416 = vpack.c.bf16 %v396, %v396
      %v417 = vpack.c.bf16 %v399, %v399
      %v418 = vpack.c.bf16 %v401, %v401
      %419 = vst [vmem:[%s213] sm:$0xf] %v403
      %420 = vst [vmem:[%s213 + $0x4] sm:$0xf] %v404
      %421 = vst [vmem:[%s213 + $0x8] sm:$0xf] %v405
      %422 = vst [vmem:[%s213 + $0xc] sm:$0xf] %v406
      %423 = vst [vmem:[%s213 + $0x10] sm:$0xf] %v407
      %424 = vst [vmem:[%s213 + $0x14] sm:$0xf] %v408
      %425 = vst [vmem:[%s213 + $0x18] sm:$0xf] %v409
      %426 = vst [vmem:[%s213 + $0x1c] sm:$0xf] %v410
      %427 = vst [vmem:[%s213 + $0x20] sm:$0xf] %v411
      %428 = vst [vmem:[%s213 + $0x24] sm:$0xf] %v412
      %429 = vst [vmem:[%s213 + $0x28] sm:$0xf] %v413
      %430 = vst [vmem:[%s213 + $0x2c] sm:$0xf] %v414
      %431 = vst [vmem:[%s213 + $0x30] sm:$0xf] %v415
      %432 = vst [vmem:[%s213 + $0x34] sm:$0xf] %v416
      %433 = vst [vmem:[%s213 + $0x38] sm:$0xf] %v417
      %434 = vst [vmem:[%s213 + $0x3c] sm:$0xf] %v418
      %v435 = vld [vmem:[%s220] sm:$0x1]
      %v436 = vadd.f32 %v364, %v366
      %v437 = vadd.f32 %v436, %v369
      %v438 = vadd.f32 %v437, %v371
      %v439 = vadd.f32 %v438, %v374
      %v440 = vadd.f32 %v439, %v376
      %v441 = vadd.f32 %v440, %v379
      %v442 = vadd.f32 %v441, %v381
      %v443 = vadd.f32 %v442, %v384
      %v444 = vadd.f32 %v443, %v386
      %v445 = vadd.f32 %v444, %v389
      %v446 = vadd.f32 %v445, %v391
      %v447 = vadd.f32 %v446, %v394
      %v448 = vadd.f32 %v447, %v396
      %v449 = vadd.f32 %v448, %v399
      %v450 = vadd.f32 %v449, %v401
      %v451 = vrot.slane %v450, 4
      %v452 = vadd.f32 %v450, %v451
      %v453 = vrot.slane %v452, 2
      %v454 = vadd.f32 %v452, %v453
      %v455 = vrot.slane %v454, 1
      %v456 = vadd.f32 %v454, %v455
      %v457 = vadd.f32 %v435, %v456
      %458 = vst [vmem:[%s220] sm:$0x1] %v457
      %v459 = vld [vmem:[%s220 + $0x1] sm:$0x1]
      %v460 = vmul.f32 %v364, %v364
      %v461 = vmul.f32 %v366, %v366
      %v462 = vmul.f32 %v369, %v369
      %v463 = vmul.f32 %v371, %v371
      %v464 = vmul.f32 %v374, %v374
      %v465 = vmul.f32 %v376, %v376
      %v466 = vmul.f32 %v379, %v379
      %v467 = vmul.f32 %v381, %v381
      %v468 = vmul.f32 %v384, %v384
      %v469 = vmul.f32 %v386, %v386
      %v470 = vmul.f32 %v389, %v389
      %v471 = vmul.f32 %v391, %v391
      %v472 = vmul.f32 %v394, %v394
      %v473 = vmul.f32 %v396, %v396
      %v474 = vmul.f32 %v399, %v399
      %v475 = vmul.f32 %v401, %v401
      %v476 = vadd.f32 %v460, %v461
      %v477 = vadd.f32 %v476, %v462
      %v478 = vadd.f32 %v477, %v463
      %v479 = vadd.f32 %v478, %v464
      %v480 = vadd.f32 %v479, %v465
      %v481 = vadd.f32 %v480, %v466
      %v482 = vadd.f32 %v481, %v467
      %v483 = vadd.f32 %v482, %v468
      %v484 = vadd.f32 %v483, %v469
      %v485 = vadd.f32 %v484, %v470
      %v486 = vadd.f32 %v485, %v471
      %v487 = vadd.f32 %v486, %v472
      %v488 = vadd.f32 %v487, %v473
      %v489 = vadd.f32 %v488, %v474
      %v490 = vadd.f32 %v489, %v475
      %v491 = vrot.slane %v490, 4
      %v492 = vadd.f32 %v490, %v491
      %v493 = vrot.slane %v492, 2
      %v494 = vadd.f32 %v492, %v493
      %v495 = vrot.slane %v494, 1
      %v496 = vadd.f32 %v494, %v495
      %v497 = vadd.f32 %v459, %v496
      %498 = vst [vmem:[%s220 + $0x1] sm:$0x1] %v497
      %s499 = smul.u32 %s19, 3
      %s500 = sadd.s32 %s499, %s20
      %s501 = smul.u32 16, %s500
      %p502 = scmp.lt.s32.totalorder %s501, 95
      %s503 = scalar_select %p502, %s501, 95
      %s504 = smul.addr %s503, 4
      %s505 = scalar_lea.vmem %s2, %s504
      %p506 = scmp.lt.s32.totalorder %s19, 1
      %s507 = scalar_select %p506, %s19, 1
      %s508 = smul.addr %s507, 8
      %s509 = scalar_lea.vmem %s3, %s508
      // Predicated region
      $region33: #{cconv_trans_block.2} parent=27 // pred_check
        %p510 = pneg %p100
      $region34: #{cconv_trans_block.2} parent=27 // pred_check_branch
        %512 = sbr.rel (%p510) target = $region36
      $region35: #{cconv_trans_block.2} parent=27 // pred_region
        %s513 = smul.u32 %s19, 3
        %s514 = sadd.s32 %s513, %s20
        %s515 = smul.u32 16, %s514
      $region36: #{cconv_trans_block.2} parent=27 // pred_fallthru
        _
      // Predicated region
      $region37: #{cconv_trans_block.2} parent=27 // pred_check
        %p516 = pneg %p126
      $region38: #{cconv_trans_block.2} parent=27 // pred_check_branch
        %518 = sbr.rel (%p516) target = $region40
      $region39: #{cconv_trans_block.2} parent=27 // pred_region
        _
      $region40: #{cconv_trans_block.2} parent=27 // pred_fallthru
        _
    $region28: #{cconv_trans_block.2} parent=5 // pred_fallthru
      _
    %p519 = scmp.le.s32.totalorder 2, %s10
    // Predicated region
    $region41: #{cconv_trans_block.2} parent=5 // pred_check
      %p520 = pneg %p519
    $region42: #{cconv_trans_block.2} parent=5 // pred_check_branch
      %522 = sbr.rel (%p520) target = $region44
    $region43: #{cconv_trans_block.2} parent=5 // pred_region
      %s523 = ssub.s32 %s10, 2
      // Predicated region
      $region45: #{cconv_trans_block.2} parent=43 // pred_check
        %p524 = pneg %p106
      $region46: #{cconv_trans_block.2} parent=43 // pred_check_branch
        %526 = sbr.rel (%p524) target = $region48
      $region47: #{cconv_trans_block.2} parent=43 // pred_region
        %s527 = smul.u32 %s21, 3
        %s528 = sadd.s32 %s527, %s22
        %s529 = smul.u32 16, %s528
        %p530 = scmp.lt.s32.totalorder %s529, 95
        %s531 = scalar_select %p530, %s529, 95
        %s532 = smul.addr %s531, 4
        %s533 = scalar_lea.vmem %s2, %s532
      $region48: #{cconv_trans_block.2} parent=43 // pred_fallthru
        _
      // Predicated region
      $region49: #{cconv_trans_block.2} parent=43 // pred_check
        %p534 = pneg %p132
      $region50: #{cconv_trans_block.2} parent=43 // pred_check_branch
        %536 = sbr.rel (%p534) target = $region52
      $region51: #{cconv_trans_block.2} parent=43 // pred_region
        %p537 = scmp.lt.s32.totalorder %s21, 1
        %s538 = scalar_select %p537, %s21, 1
        %s539 = smul.addr %s538, 8
        %s540 = scalar_lea.vmem %s3, %s539
      $region52: #{cconv_trans_block.2} parent=43 // pred_fallthru
        _
    $region44: #{cconv_trans_block.2} parent=5 // pred_fallthru
      _
  $region6: #{cconv_trans_block.2} parent=0 // loop_footer
    %s14 = sadd.s32 1, %s10
  $region7: #{cconv_trans_block.2} parent=0 // loop_footer_branch
    %9 = sbr.rel target = $region3
  $region8: #{cconv_trans_block.2} parent=0 // loop_exit
    _

</llo_original>
